<compile_context>
chip_gen: v7x
topology: tpu7x:2x2x1
jax: 0.10.0
libtpu: 0.0.40
codegen_flags: <defaults>
</compile_context>

<pallas_src>
import jax
import jax.numpy as jnp
from jax.experimental import pallas as pl
from jax.experimental.pallas import tpu as pltpu

LANE = 128


def _round_up(n, m):
    return ((n + m - 1) // m) * m


# --------------------------------------------------------------------------- #
# Kernel
# --------------------------------------------------------------------------- #
def _mlp_actor_critic_kernel(x_ref,
                             w1_ref, b1_ref,
                             w2_ref, b2_ref,
                             w3_ref, b3_ref,
                             wh_ref, bh_ref,
                             pol_ref, val_ref):
    """One batch tile of the 3-layer MLP + fused (policy|value) head."""
    wdt = w1_ref.dtype                       # MXU input dtype (f32 or bf16)
    x = x_ref[...].astype(wdt)

    # fc1 + ReLU (bias/relu in f32: safe on v5e, cheap everywhere)
    h = jnp.dot(x, w1_ref[...], preferred_element_type=jnp.float32) + b1_ref[...]
    h = jnp.maximum(h, 0.0)

    # fc2 + ReLU
    h = jnp.dot(h.astype(wdt), w2_ref[...],
                preferred_element_type=jnp.float32) + b2_ref[...]
    h = jnp.maximum(h, 0.0)

    # fc3 + ReLU
    h = jnp.dot(h.astype(wdt), w3_ref[...],
                preferred_element_type=jnp.float32) + b3_ref[...]
    h = jnp.maximum(h, 0.0)

    # fused policy|value head: one MXU push, then split into the two real outputs
    head = jnp.dot(h.astype(wdt), wh_ref[...],
                   preferred_element_type=jnp.float32) + bh_ref[...]
    actions = pol_ref.shape[1]
    pol_ref[...] = head[:, :actions].astype(pol_ref.dtype)
    val_ref[...] = head[:, actions:actions + 1].astype(val_ref.dtype)


# --------------------------------------------------------------------------- #
# Parameter preparation (done once, outside the hot path)
# --------------------------------------------------------------------------- #
def prepare_params(p, weight_dtype=jnp.bfloat16):
    """Pad out-features to 128 lanes, fuse the two heads, cast weights.

    weight_dtype=jnp.bfloat16 (default) is MXU-native and halves resident weight
    bytes; pass jnp.float32 for bit-tight numerics. Biases / accumulation always
    stay f32.
    """
    in_size = p["w1"].shape[0]
    fc1, fc2, fc3 = p["w1"].shape[1], p["w2"].shape[1], p["w3"].shape[1]
    actions = p["wp"].shape[1]

    fc1_p = _round_up(fc1, LANE)
    fc2_p = _round_up(fc2, LANE)
    fc3_p = _round_up(fc3, LANE)
    head_p = _round_up(actions + 1, LANE)

    def pad2(w, rows, cols):
        return jnp.pad(w, ((0, rows - w.shape[0]), (0, cols - w.shape[1])))

    wh = jnp.concatenate([p["wp"], p["wv"]], axis=1)   # [fc3, actions+1]
    bh = jnp.concatenate([p["bp"], p["bv"]], axis=1)   # [1,   actions+1]

    return dict(
        w1=pad2(p["w1"], in_size, fc1_p).astype(weight_dtype),
        b1=pad2(p["b1"], 1, fc1_p).astype(jnp.float32),
        w2=pad2(p["w2"], fc1_p, fc2_p).astype(weight_dtype),
        b2=pad2(p["b2"], 1, fc2_p).astype(jnp.float32),
        w3=pad2(p["w3"], fc2_p, fc3_p).astype(weight_dtype),
        b3=pad2(p["b3"], 1, fc3_p).astype(jnp.float32),
        wh=pad2(wh, fc3_p, head_p).astype(weight_dtype),
        bh=pad2(bh, 1, head_p).astype(jnp.float32),
        actions=actions,
    )


# --------------------------------------------------------------------------- #
# Forward wrapper
# --------------------------------------------------------------------------- #
def nn_forward(state, prepped, tile_b=2048):
    """Pallas TPU implementation of NN.forward.

    state:   [B, input_size] float32
    prepped: output of prepare_params(...)
    returns: (policy [B, actions], value [B, 1]) float32
    """
    B, in_size = state.shape
    actions = prepped["actions"]

    # ---- batch tile selection -------------------------------------------- #
    # multiple of 8 sublanes, capped at 4096 (keeps activations well under the
    # explicit 32 MiB VMEM limit even on v7x / v5e defaults)
    tile_b = min(_round_up(max(tile_b, 8), 8), 4096)
    b8 = _round_up(B, 8)
    # prefer >=2 grid steps for large batches so v7x shards across both TCs
    two_way = _round_up(pl.cdiv(b8, 2), 8)
    tile_b = min(tile_b, two_way)
    B_pad = _round_up(b8, tile_b)

    if B_pad != B:
        state = jnp.pad(state, ((0, B_pad - B), (0, 0)))
    state = state.astype(jnp.float32)

    grid = (B_pad // tile_b,)

    def resident(arr):
        # full-array block, same block every grid step -> stays in VMEM
        return pl.BlockSpec(arr.shape, lambda i: (0, 0))

    weight_args = (prepped["w1"], prepped["b1"],
                   prepped["w2"], prepped["b2"],
                   prepped["w3"], prepped["b3"],
                   prepped["wh"], prepped["bh"])

    in_specs = [pl.BlockSpec((tile_b, in_size), lambda i: (i, 0))] + \
               [resident(a) for a in weight_args]
    # two lane-exact outputs: last dims equal the full array dims, so BlockSpecs
    # are legal and no padded f32 writeback hits HBM.
    out_specs = (pl.BlockSpec((tile_b, actions), lambda i: (i, 0)),
                 pl.BlockSpec((tile_b, 1), lambda i: (i, 0)))
    out_shape = (jax.ShapeDtypeStruct((B_pad, actions), jnp.float32),
                 jax.ShapeDtypeStruct((B_pad, 1), jnp.float32))

    # Advisory cost hint so XLA schedules this small custom call sensibly.
    flops = 2 * B_pad * (in_size * prepped["w1"].shape[1]
                         + prepped["w2"].shape[0] * prepped["w2"].shape[1]
                         + prepped["w3"].shape[0] * prepped["w3"].shape[1]
                         + prepped["wh"].shape[0] * prepped["wh"].shape[1])
    bytes_accessed = (state.size * 4
                      + sum(int(a.size) * a.dtype.itemsize for a in weight_args)
                      + B_pad * (actions + 1) * 4)
    cost = pl.CostEstimate(flops=flops, transcendentals=0,
                           bytes_accessed=bytes_accessed)

    policy, value = pl.pallas_call(
        _mlp_actor_critic_kernel,
        out_shape=out_shape,
        grid=grid,
        in_specs=in_specs,
        out_specs=out_specs,
        compiler_params=pltpu.CompilerParams(
            dimension_semantics=("parallel",),      # shards batch tiles over both TCs on v7x
            vmem_limit_bytes=32 * 1024 * 1024,      # v5e-safe explicit limit for big tiles
        ),
        cost_estimate=cost,
    )(state, *weight_args)

    if B_pad != B:
        policy = policy[:B]
        value = value[:B]
    return policy, value


# --------------------------------------------------------------------------- #
# Init + reference
# --------------------------------------------------------------------------- #
def init_params(key, input_size, actions_size,
                fc1_dims=128, fc2_dims=64, fc3_dims=32):
    """Deterministic PyTorch-style (uniform +/- 1/sqrt(fan_in)) init."""
    def linear(key, fan_in, fan_out):
        kw, kb = jax.random.split(key)
        bound = 1.0 / jnp.sqrt(jnp.float32(fan_in))
        w = jax.random.uniform(kw, (fan_in, fan_out), jnp.float32, -bound, bound)
        b = jax.random.uniform(kb, (1, fan_out), jnp.float32, -bound, bound)
        return w, b

    keys = jax.random.split(key, 5)
    w1, b1 = linear(keys[0], input_size, fc1_dims)
    w2, b2 = linear(keys[1], fc1_dims, fc2_dims)
    w3, b3 = linear(keys[2], fc2_dims, fc3_dims)
    wp, bp = linear(keys[3], fc3_dims, actions_size)
    wv, bv = linear(keys[4], fc3_dims, 1)
    return dict(w1=w1, b1=b1, w2=w2, b2=b2, w3=w3, b3=b3,
                wp=wp, bp=bp, wv=wv, bv=bv)


def reference_forward(state, p):
    x = jnp.maximum(state @ p["w1"] + p["b1"], 0.0)
    x = jnp.maximum(x @ p["w2"] + p["b2"], 0.0)
    x = jnp.maximum(x @ p["w3"] + p["b3"], 0.0)
    return x @ p["wp"] + p["bp"], x @ p["wv"] + p["bv"]


# TODO(synk): optimizer (Adam) / .to(device) / T.tensor re-wrapping in the PyTorch
# module are training/host plumbing with no Pallas equivalent; only forward is done.
# --------------------------------------------------------------------------- #
if __name__ == "__main__":
    key = jax.random.PRNGKey(0)
    k_param, k_state_small, k_state_big = jax.random.split(key, 3)

    input_size = 32
    actions_size = 8

    params = init_params(k_param, input_size, actions_size)

    # ---- f32 weights: tight numerical check ------------------------------ #
    prepped_f32 = prepare_params(params, weight_dtype=jnp.float32)

    batch = 4
    state = jax.random.normal(k_state_small, (batch, input_size), jnp.float32)
    policy, value = nn_forward(state, prepped_f32)
    jax.block_until_ready((policy, value))

    ref_policy, ref_value = reference_forward(state, params)
    assert policy.shape == (batch, actions_size)
    assert value.shape == (batch, 1)
    assert jnp.allclose(policy, ref_policy, atol=1e-5, rtol=1e-5)
    assert jnp.allclose(value, ref_value, atol=1e-5, rtol=1e-5)

    # Larger, non-multiple batch -> exercises padding + the 2-step grid path.
    big_batch = 300
    state_b = jax.random.normal(k_state_big, (big_batch, input_size), jnp.float32)
    policy_b, value_b = nn_forward(state_b, prepped_f32, tile_b=2048)
    jax.block_until_ready((policy_b, value_b))

    ref_policy_b, ref_value_b = reference_forward(state_b, params)
    assert policy_b.shape == (big_batch, actions_size)
    assert value_b.shape == (big_batch, 1)
    assert jnp.allclose(policy_b, ref_policy_b, atol=1e-5, rtol=1e-5)
    assert jnp.allclose(value_b, ref_value_b, atol=1e-5, rtol=1e-5)

    # ---- bf16 weights (default, throughput path): loose check ------------- #
    prepped_bf16 = prepare_params(params)          # weight_dtype=bf16 default
    policy_h, value_h = nn_forward(state_b, prepped_bf16)
    jax.block_until_ready((policy_h, value_h))
    assert policy_h.shape == (big_batch, actions_size)
    assert value_h.shape == (big_batch, 1)
    assert jnp.allclose(policy_h, ref_policy_b, atol=1e-1, rtol=1e-1)
    assert jnp.allclose(value_h, ref_value_b, atol=1e-1, rtol=1e-1)

    print("KERNEL_OK")
</pallas_src>

<mosaic_0001>
module attributes {stable_mosaic.version = 11 : i64} {
  func.func @_mlp_actor_critic_kernel(%arg0: i32, %arg1: memref<8x32xf32, #tpu.memory_space<vmem>>, %arg2: memref<32x128xf32, #tpu.memory_space<vmem>>, %arg3: memref<1x128xf32, #tpu.memory_space<vmem>>, %arg4: memref<128x128xf32, #tpu.memory_space<vmem>>, %arg5: memref<1x128xf32, #tpu.memory_space<vmem>>, %arg6: memref<128x128xf32, #tpu.memory_space<vmem>>, %arg7: memref<1x128xf32, #tpu.memory_space<vmem>>, %arg8: memref<128x128xf32, #tpu.memory_space<vmem>>, %arg9: memref<1x128xf32, #tpu.memory_space<vmem>>, %arg10: memref<8x8xf32, #tpu.memory_space<vmem>>, %arg11: memref<8x1xf32, #tpu.memory_space<vmem>>) attributes {dimension_semantics = [#tpu.dimension_semantics<parallel>], iteration_bounds = array<i64: 1>, scalar_prefetch = 0 : i64, scratch_operands = 0 : i64, tpu.core_type = #tpu.core_type<tc>, window_params = [{transform_indices = @transform_0, window_bounds = array<i64: 8, 32>}, {pipeline_mode = #tpu.pipeline_mode<synchronous>, transform_indices = @transform_1, window_bounds = array<i64: 32, 128>}, {pipeline_mode = #tpu.pipeline_mode<synchronous>, transform_indices = @transform_2, window_bounds = array<i64: 1, 128>}, {pipeline_mode = #tpu.pipeline_mode<synchronous>, transform_indices = @transform_3, window_bounds = array<i64: 128, 128>}, {pipeline_mode = #tpu.pipeline_mode<synchronous>, transform_indices = @transform_4, window_bounds = array<i64: 1, 128>}, {pipeline_mode = #tpu.pipeline_mode<synchronous>, transform_indices = @transform_5, window_bounds = array<i64: 128, 128>}, {pipeline_mode = #tpu.pipeline_mode<synchronous>, transform_indices = @transform_6, window_bounds = array<i64: 1, 128>}, {pipeline_mode = #tpu.pipeline_mode<synchronous>, transform_indices = @transform_7, window_bounds = array<i64: 128, 128>}, {pipeline_mode = #tpu.pipeline_mode<synchronous>, transform_indices = @transform_8, window_bounds = array<i64: 1, 128>}, {transform_indices = @transform_9, window_bounds = array<i64: 8, 8>}, {transform_indices = @transform_10, window_bounds = array<i64: 8, 1>}]} {
    %c0 = arith.constant 0 : index
    %c0_0 = arith.constant 0 : index
    %0 = vector.load %arg1[%c0, %c0_0] : memref<8x32xf32, #tpu.memory_space<vmem>>, vector<8x32xf32>
    %c0_1 = arith.constant 0 : index
    %c0_2 = arith.constant 0 : index
    %1 = vector.load %arg2[%c0_1, %c0_2] : memref<32x128xf32, #tpu.memory_space<vmem>>, vector<32x128xf32>
    %cst = arith.constant dense<0.000000e+00> : vector<8x128xf32>
    %2 = tpu.matmul %0, %1, %cst {dimension_numbers = #tpu.dot_dimension_numbers<[1], [0], [0], [1], [0, 0, 1, 1], [], []>} : vector<8x32xf32>, vector<32x128xf32>, vector<8x128xf32> -> vector<8x128xf32>
    %c0_3 = arith.constant 0 : index
    %c0_4 = arith.constant 0 : index
    %3 = vector.load %arg3[%c0_3, %c0_4] : memref<1x128xf32, #tpu.memory_space<vmem>>, vector<1x128xf32>
    %4 = vector.broadcast %3 : vector<1x128xf32> to vector<8x128xf32>
    %5 = arith.addf %2, %4 : vector<8x128xf32>
    %cst_5 = arith.constant 0.000000e+00 : f32
    %6 = vector.broadcast %cst_5 : f32 to vector<8x128xf32>
    %7 = arith.maximumf %5, %6 : vector<8x128xf32>
    %c0_6 = arith.constant 0 : index
    %c0_7 = arith.constant 0 : index
    %8 = vector.load %arg4[%c0_6, %c0_7] : memref<128x128xf32, #tpu.memory_space<vmem>>, vector<128x128xf32>
    %cst_8 = arith.constant dense<0.000000e+00> : vector<8x128xf32>
    %9 = tpu.matmul %7, %8, %cst_8 {dimension_numbers = #tpu.dot_dimension_numbers<[1], [0], [0], [1], [0, 0, 1, 1], [], []>} : vector<8x128xf32>, vector<128x128xf32>, vector<8x128xf32> -> vector<8x128xf32>
    %c0_9 = arith.constant 0 : index
    %c0_10 = arith.constant 0 : index
    %10 = vector.load %arg5[%c0_9, %c0_10] : memref<1x128xf32, #tpu.memory_space<vmem>>, vector<1x128xf32>
    %11 = vector.broadcast %10 : vector<1x128xf32> to vector<8x128xf32>
    %12 = arith.addf %9, %11 : vector<8x128xf32>
    %cst_11 = arith.constant 0.000000e+00 : f32
    %13 = vector.broadcast %cst_11 : f32 to vector<8x128xf32>
    %14 = arith.maximumf %12, %13 : vector<8x128xf32>
    %c0_12 = arith.constant 0 : index
    %c0_13 = arith.constant 0 : index
    %15 = vector.load %arg6[%c0_12, %c0_13] : memref<128x128xf32, #tpu.memory_space<vmem>>, vector<128x128xf32>
    %cst_14 = arith.constant dense<0.000000e+00> : vector<8x128xf32>
    %16 = tpu.matmul %14, %15, %cst_14 {dimension_numbers = #tpu.dot_dimension_numbers<[1], [0], [0], [1], [0, 0, 1, 1], [], []>} : vector<8x128xf32>, vector<128x128xf32>, vector<8x128xf32> -> vector<8x128xf32>
    %c0_15 = arith.constant 0 : index
    %c0_16 = arith.constant 0 : index
    %17 = vector.load %arg7[%c0_15, %c0_16] : memref<1x128xf32, #tpu.memory_space<vmem>>, vector<1x128xf32>
    %18 = vector.broadcast %17 : vector<1x128xf32> to vector<8x128xf32>
    %19 = arith.addf %16, %18 : vector<8x128xf32>
    %cst_17 = arith.constant 0.000000e+00 : f32
    %20 = vector.broadcast %cst_17 : f32 to vector<8x128xf32>
    %21 = arith.maximumf %19, %20 : vector<8x128xf32>
    %c0_18 = arith.constant 0 : index
    %c0_19 = arith.constant 0 : index
    %22 = vector.load %arg8[%c0_18, %c0_19] : memref<128x128xf32, #tpu.memory_space<vmem>>, vector<128x128xf32>
    %cst_20 = arith.constant dense<0.000000e+00> : vector<8x128xf32>
    %23 = tpu.matmul %21, %22, %cst_20 {dimension_numbers = #tpu.dot_dimension_numbers<[1], [0], [0], [1], [0, 0, 1, 1], [], []>} : vector<8x128xf32>, vector<128x128xf32>, vector<8x128xf32> -> vector<8x128xf32>
    %c0_21 = arith.constant 0 : index
    %c0_22 = arith.constant 0 : index
    %24 = vector.load %arg9[%c0_21, %c0_22] : memref<1x128xf32, #tpu.memory_space<vmem>>, vector<1x128xf32>
    %25 = vector.broadcast %24 : vector<1x128xf32> to vector<8x128xf32>
    %26 = arith.addf %23, %25 : vector<8x128xf32>
    %27 = vector.extract_strided_slice %26 {offsets = [0, 0], sizes = [8, 8], strides = [1, 1]} : vector<8x128xf32> to vector<8x8xf32>
    %c0_23 = arith.constant 0 : index
    %c0_24 = arith.constant 0 : index
    %28 = vector.load %arg10[%c0_23, %c0_24] : memref<8x8xf32, #tpu.memory_space<vmem>>, vector<8x8xf32>
    tpu.vector_store %arg10[%c0_23, %c0_24], %27 {strides = array<i32>} : memref<8x8xf32, #tpu.memory_space<vmem>>, vector<8x8xf32>,
    %29 = vector.extract_strided_slice %26 {offsets = [0, 8], sizes = [8, 1], strides = [1, 1]} : vector<8x128xf32> to vector<8x1xf32>
    %c0_25 = arith.constant 0 : index
    %c0_26 = arith.constant 0 : index
    %30 = vector.load %arg11[%c0_25, %c0_26] : memref<8x1xf32, #tpu.memory_space<vmem>>, vector<8x1xf32>
    tpu.vector_store %arg11[%c0_25, %c0_26], %29 {strides = array<i32>} : memref<8x1xf32, #tpu.memory_space<vmem>>, vector<8x1xf32>,
    return
  }
  func.func @transform_0(%arg0: i32) -> (i32, i32) {
    %c0_i32 = arith.constant 0 : i32
    %c0_i32_0 = arith.constant 0 : i32
    return %arg0, %c0_i32 : i32, i32
  }
  func.func @transform_1(%arg0: i32) -> (i32, i32) {
    %c0_i32 = arith.constant 0 : i32
    %c0_i32_0 = arith.constant 0 : i32
    %c0_i32_1 = arith.constant 0 : i32
    return %c0_i32, %c0_i32_0 : i32, i32
  }
  func.func @transform_2(%arg0: i32) -> (i32, i32) {
    %c0_i32 = arith.constant 0 : i32
    %c0_i32_0 = arith.constant 0 : i32
    %c0_i32_1 = arith.constant 0 : i32
    return %c0_i32, %c0_i32_0 : i32, i32
  }
  func.func @transform_3(%arg0: i32) -> (i32, i32) {
    %c0_i32 = arith.constant 0 : i32
    %c0_i32_0 = arith.constant 0 : i32
    %c0_i32_1 = arith.constant 0 : i32
    return %c0_i32, %c0_i32_0 : i32, i32
  }
  func.func @transform_4(%arg0: i32) -> (i32, i32) {
    %c0_i32 = arith.constant 0 : i32
    %c0_i32_0 = arith.constant 0 : i32
    %c0_i32_1 = arith.constant 0 : i32
    return %c0_i32, %c0_i32_0 : i32, i32
  }
  func.func @transform_5(%arg0: i32) -> (i32, i32) {
    %c0_i32 = arith.constant 0 : i32
    %c0_i32_0 = arith.constant 0 : i32
    %c0_i32_1 = arith.constant 0 : i32
    return %c0_i32, %c0_i32_0 : i32, i32
  }
  func.func @transform_6(%arg0: i32) -> (i32, i32) {
    %c0_i32 = arith.constant 0 : i32
    %c0_i32_0 = arith.constant 0 : i32
    %c0_i32_1 = arith.constant 0 : i32
    return %c0_i32, %c0_i32_0 : i32, i32
  }
  func.func @transform_7(%arg0: i32) -> (i32, i32) {
    %c0_i32 = arith.constant 0 : i32
    %c0_i32_0 = arith.constant 0 : i32
    %c0_i32_1 = arith.constant 0 : i32
    return %c0_i32, %c0_i32_0 : i32, i32
  }
  func.func @transform_8(%arg0: i32) -> (i32, i32) {
    %c0_i32 = arith.constant 0 : i32
    %c0_i32_0 = arith.constant 0 : i32
    %c0_i32_1 = arith.constant 0 : i32
    return %c0_i32, %c0_i32_0 : i32, i32
  }
  func.func @transform_9(%arg0: i32) -> (i32, i32) {
    %c0_i32 = arith.constant 0 : i32
    %c0_i32_0 = arith.constant 0 : i32
    return %arg0, %c0_i32 : i32, i32
  }
  func.func @transform_10(%arg0: i32) -> (i32, i32) {
    %c0_i32 = arith.constant 0 : i32
    %c0_i32_0 = arith.constant 0 : i32
    return %arg0, %c0_i32 : i32, i32
  }
}

</mosaic_0001>

<llo_original>
// kernel: tpu_custom_call.1
$region0: #{tpu_custom_call.1}
  #allocation0 [shape = 'u32[]', space=smem, size = 0x4, offset = 0x4, fixed_abs, tag = 'smem constant byte address 0x4 - core index']
  #allocation1 [shape = 'u32[144,128]{1,0:T(1,128)}', space=vmem, size = 0x12000, scoped, tag = 'internal scratch']
  %s0 = inlined_call_operand.hbm [shape: f32[8,32], index: 0, kind: input, shape index: {}]
  %s1 = inlined_call_operand.hbm [shape: f32[32,128], index: 1, kind: input, shape index: {}]
  %s2 = inlined_call_operand.vmem [shape: f32[1,128], index: 2, kind: input, shape index: {}]
  %s3 = inlined_call_operand.hbm [shape: f32[128,128], index: 3, kind: input, shape index: {}]
  %s4 = inlined_call_operand.vmem [shape: f32[1,128], index: 4, kind: input, shape index: {}]
  %s5 = inlined_call_operand.hbm [shape: f32[128,128], index: 5, kind: input, shape index: {}]
  %s6 = inlined_call_operand.vmem [shape: f32[1,128], index: 6, kind: input, shape index: {}]
  %s7 = inlined_call_operand.hbm [shape: f32[128,128], index: 7, kind: input, shape index: {}]
  %s8 = inlined_call_operand.vmem [shape: f32[1,128], index: 8, kind: input, shape index: {}]
  %s9 = inlined_call_operand.hbm [shape: f32[8,8], index: 9, kind: output, shape index: {0}]
  %s10 = inlined_call_operand.vmem [shape: f32[8,1], index: 10, kind: output, shape index: {1}]
  %11 = xla_tuple %s9, %s10
  %s12 = sld [smem:[#allocation0]]
  $region74: #{tpu_custom_call.1} parent=0
    _
  %s14 = ssub.s32 1, %s12
  %s15 = scalar_select 0, %s14, %s12
  $region1: #{tpu_custom_call.1} parent=0
    #allocation2 [shape = 'u8[4096]{0}', space=vmem, size = 0x1000, scoped, tag = 'input window, operand 0, single buffered']
    #allocation3 [shape = 's32[1]{0}', space=sflag, size = 0x4, scoped, tag = 'scoped memory for tpu_custom_call.1']
    #allocation4 [shape = 's32[1]{0}', space=sflag, size = 0x4, scoped, tag = 'scoped memory for tpu_custom_call.1']
    #allocation5 [shape = 'u8[16384]{0}', space=vmem, size = 0x4000, scoped, tag = 'input window, operand 1, single buffered']
    #allocation6 [shape = 's32[1]{0}', space=sflag, size = 0x4, scoped, tag = 'scoped memory for tpu_custom_call.1']
    #allocation7 [shape = 'u8[65536]{0}', space=vmem, size = 0x10000, scoped, tag = 'input window, operand 3, single buffered']
    #allocation8 [shape = 'u8[65536]{0}', space=vmem, size = 0x10000, scoped, tag = 'input window, operand 5, single buffered']
    #allocation9 [shape = 's32[1]{0}', space=sflag, size = 0x4, scoped, tag = 'scoped memory for tpu_custom_call.1']
    #allocation10 [shape = 'u8[65536]{0}', space=vmem, size = 0x10000, scoped, tag = 'input window, operand 7, single buffered']
    #allocation11 [shape = 'u8[4096]{0}', space=vmem, size = 0x1000, scoped, tag = 'output window, operand 0, single buffered']
    %16 = vsyncpa [#allocation3], 0
    %17 = vsyncpa [#allocation6], 0
    %18 = vsyncpa [#allocation9], 0
    %19 = vsyncpa [#allocation4], 0
    // Predicated region
    $region2: #{tpu_custom_call.1} parent=1 // pred_check
      _
    $region3: #{tpu_custom_call.1} parent=1 // pred_check_branch
      %21 = sbr.rel (0) target = $region5
    $region4: #{tpu_custom_call.1} parent=1 // pred_region
      %s23 = ssub.s32 128, 128
      %24 = vsyncadd [#allocation3], %s23
      %s26 = sshll.u32 [#allocation2], 4
      %s27 = int_to_ptr.vmem [resolvable:$true] %s26
      %29 = dma.hbm_to_vmem [thread:$0]  %s0, 128, %s27, [#allocation3]
    $region5: #{tpu_custom_call.1} parent=1 // pred_fallthru
      _
    // Predicated region
    $region6: #{tpu_custom_call.1} parent=1 // pred_check
      _
    $region7: #{tpu_custom_call.1} parent=1 // pred_check_branch
      %31 = sbr.rel (0) target = $region9
    $region8: #{tpu_custom_call.1} parent=1 // pred_region
      %s33 = ssub.s32 512, 512
      %34 = vsyncadd [#allocation6], %s33
      %s35 = sshll.u32 [#allocation5], 4
      %s36 = int_to_ptr.vmem [resolvable:$true] %s35
      %41 = dma.hbm_to_vmem [thread:$0]  %s1, 512, %s36, [#allocation6], 128, 128, 8
    $region9: #{tpu_custom_call.1} parent=1 // pred_fallthru
      _
    // Predicated region
    $region10: #{tpu_custom_call.1} parent=1 // pred_check
      _
    $region11: #{tpu_custom_call.1} parent=1 // pred_check_branch
      %43 = sbr.rel (0) target = $region13
    $region12: #{tpu_custom_call.1} parent=1 // pred_region
      _
    $region13: #{tpu_custom_call.1} parent=1 // pred_fallthru
      _
    // Predicated region
    $region14: #{tpu_custom_call.1} parent=1 // pred_check
      _
    $region15: #{tpu_custom_call.1} parent=1 // pred_check_branch
      %45 = sbr.rel (0) target = $region17
    $region16: #{tpu_custom_call.1} parent=1 // pred_region
      %s47 = ssub.s32 2048, 2048
      %48 = vsyncadd [#allocation6], %s47
      %s49 = sshll.u32 [#allocation7], 4
      %s50 = int_to_ptr.vmem [resolvable:$true] %s49
      %55 = dma.hbm_to_vmem [thread:$0]  %s3, 2048, %s50, [#allocation6], 128, 128, 8
    $region17: #{tpu_custom_call.1} parent=1 // pred_fallthru
      _
    // Predicated region
    $region18: #{tpu_custom_call.1} parent=1 // pred_check
      _
    $region19: #{tpu_custom_call.1} parent=1 // pred_check_branch
      %57 = sbr.rel (0) target = $region21
    $region20: #{tpu_custom_call.1} parent=1 // pred_region
      _
    $region21: #{tpu_custom_call.1} parent=1 // pred_fallthru
      _
    // Predicated region
    $region22: #{tpu_custom_call.1} parent=1 // pred_check
      _
    $region23: #{tpu_custom_call.1} parent=1 // pred_check_branch
      %59 = sbr.rel (0) target = $region25
    $region24: #{tpu_custom_call.1} parent=1 // pred_region
      %s61 = ssub.s32 2048, 2048
      %62 = vsyncadd [#allocation9], %s61
      %s63 = sshll.u32 [#allocation8], 4
      %s64 = int_to_ptr.vmem [resolvable:$true] %s63
      %69 = dma.hbm_to_vmem [thread:$0]  %s5, 2048, %s64, [#allocation9], 128, 128, 8
    $region25: #{tpu_custom_call.1} parent=1 // pred_fallthru
      _
    // Predicated region
    $region26: #{tpu_custom_call.1} parent=1 // pred_check
      _
    $region27: #{tpu_custom_call.1} parent=1 // pred_check_branch
      %71 = sbr.rel (0) target = $region29
    $region28: #{tpu_custom_call.1} parent=1 // pred_region
      _
    $region29: #{tpu_custom_call.1} parent=1 // pred_fallthru
      _
    // Predicated region
    $region30: #{tpu_custom_call.1} parent=1 // pred_check
      _
    $region31: #{tpu_custom_call.1} parent=1 // pred_check_branch
      %73 = sbr.rel (0) target = $region33
    $region32: #{tpu_custom_call.1} parent=1 // pred_region
      %s75 = ssub.s32 2048, 2048
      %76 = vsyncadd [#allocation9], %s75
      %s77 = sshll.u32 [#allocation10], 4
      %s78 = int_to_ptr.vmem [resolvable:$true] %s77
      %83 = dma.hbm_to_vmem [thread:$0]  %s7, 2048, %s78, [#allocation9], 128, 128, 8
    $region33: #{tpu_custom_call.1} parent=1 // pred_fallthru
      _
    // Predicated region
    $region34: #{tpu_custom_call.1} parent=1 // pred_check
      _
    $region35: #{tpu_custom_call.1} parent=1 // pred_check_branch
      %85 = sbr.rel (0) target = $region37
    $region36: #{tpu_custom_call.1} parent=1 // pred_region
      _
    $region37: #{tpu_custom_call.1} parent=1 // pred_fallthru
      _
    // Predicated region
    $region38: #{tpu_custom_call.1} parent=1 // pred_check
      _
    $region39: #{tpu_custom_call.1} parent=1 // pred_check_branch
      %87 = sbr.rel (0) target = $region41
    $region40: #{tpu_custom_call.1} parent=1 // pred_region
      %88 = dma.done [#allocation3], 128
    $region41: #{tpu_custom_call.1} parent=1 // pred_fallthru
      _
    // Predicated region
    $region42: #{tpu_custom_call.1} parent=1 // pred_check
      _
    $region43: #{tpu_custom_call.1} parent=1 // pred_check_branch
      %90 = sbr.rel (0) target = $region45
    $region44: #{tpu_custom_call.1} parent=1 // pred_region
      %91 = dma.done [#allocation6], 512
    $region45: #{tpu_custom_call.1} parent=1 // pred_fallthru
      _
    // Predicated region
    $region46: #{tpu_custom_call.1} parent=1 // pred_check
      _
    $region47: #{tpu_custom_call.1} parent=1 // pred_check_branch
      %93 = sbr.rel (0) target = $region49
    $region48: #{tpu_custom_call.1} parent=1 // pred_region
      %94 = dma.done [#allocation6], 2048
    $region49: #{tpu_custom_call.1} parent=1 // pred_fallthru
      _
    // Predicated region
    $region50: #{tpu_custom_call.1} parent=1 // pred_check
      _
    $region51: #{tpu_custom_call.1} parent=1 // pred_check_branch
      %96 = sbr.rel (0) target = $region53
    $region52: #{tpu_custom_call.1} parent=1 // pred_region
      %97 = dma.done [#allocation9], 2048
    $region53: #{tpu_custom_call.1} parent=1 // pred_fallthru
      _
    // Predicated region
    $region54: #{tpu_custom_call.1} parent=1 // pred_check
      _
    $region55: #{tpu_custom_call.1} parent=1 // pred_check_branch
      %99 = sbr.rel (0) target = $region57
    $region56: #{tpu_custom_call.1} parent=1 // pred_region
      %100 = dma.done [#allocation9], 2048
    $region57: #{tpu_custom_call.1} parent=1 // pred_fallthru
      _
    %v101 = vld [vmem:[#allocation2] sm:$0xff]
    %v102 = vld [vmem:[#allocation5] sm:$0xff]
    %v103 = vld [vmem:[#allocation5 + $0x8] sm:$0xff]
    %v104 = vld [vmem:[#allocation5 + $0x10] sm:$0xff]
    %v105 = vld [vmem:[#allocation5 + $0x18] sm:$0xff]
    %v106 = vld [vmem:[%s2] sm:$0x1]
    %v108 = vlaneseq
    %v109 = vshrl.u32 %v108, 7
    %v110 = vsub.s32 0, %v109
    %v111 = vrot.slane %v106, %v110
    %vm113 = vcmask 261120
    %v115 = vsel %vm113, %v101, 0
    %117 = vmatprep.subr.mxu0 0.0
    %118 = vmatpush1.msra.mxu0 %v102
    %119 = vmatprep.subr.mxu0 0.0
    %120 = vmatpush1.msra.mxu0 %v103
    %121 = vmatprep.subr.mxu0 0.0
    %122 = vmatpush1.msra.mxu0 %v104
    %123 = vmatprep.subr.mxu0 0.0
    %124 = vmatpush1.msra.mxu0 %v105
    %125 = vmatprep.subr.mxu0 0.0
    %126 = vmatpush1.msra.mxu0 0.0
    %127 = vmatprep.subr.mxu0 0.0
    %128 = vmatpush1.msra.mxu0 0.0
    %129 = vmatprep.subr.mxu0 0.0
    %130 = vmatpush1.msra.mxu0 0.0
    %131 = vmatprep.subr.mxu0 0.0
    %132 = vmatpush1.msra.mxu0 0.0
    %133 = vmatprep.subr.mxu0 0.0
    %134 = vmatpush1.msra.mxu0 0.0
    %135 = vmatprep.subr.mxu0 0.0
    %136 = vmatpush1.msra.mxu0 0.0
    %137 = vmatprep.subr.mxu0 0.0
    %138 = vmatpush1.msra.mxu0 0.0
    %139 = vmatprep.subr.mxu0 0.0
    %140 = vmatpush1.msra.mxu0 0.0
    %141 = vmatprep.subr.mxu0 0.0
    %142 = vmatpush1.msra.mxu0 0.0
    %143 = vmatprep.subr.mxu0 0.0
    %144 = vmatpush1.msra.mxu0 0.0
    %145 = vmatprep.subr.mxu0 0.0
    %146 = vmatpush1.msra.mxu0 0.0
    %147 = vmatprep.subr.mxu0 0.0
    %148 = vmatpush1.msra.mxu0 0.0
    %149 = vmatprep.subr.mxu0 0.0
    %150 = vmatpush1.msra.mxu0 0.0
    %151 = vmatprep.subr.mxu0 0.0
    %152 = vmatpush1.msra.mxu0 0.0
    %153 = vmatprep.subr.mxu0 0.0
    %154 = vmatpush1.msra.mxu0 0.0
    %155 = vmatprep.subr.mxu0 0.0
    %156 = vmatpush1.msra.mxu0 0.0
    %157 = vmatprep.subr.mxu0 0.0
    %158 = vmatpush1.msra.mxu0 0.0
    %159 = vmatprep.subr.mxu0 0.0
    %160 = vmatpush1.msra.mxu0 0.0
    %161 = vmatprep.subr.mxu0 0.0
    %162 = vmatpush1.msra.mxu0 0.0
    %163 = vmatprep.subr.mxu0 0.0
    %164 = vmatpush1.msra.mxu0 0.0
    %165 = vmatprep.subr.mxu0 0.0
    %166 = vmatpush1.msra.mxu0 0.0
    %167 = vmatprep.subr.mxu0 0.0
    %168 = vmatpush1.msra.mxu0 0.0
    %169 = vmatprep.subr.mxu0 0.0
    %170 = vmatpush1.msra.mxu0 0.0
    %171 = vmatprep.subr.mxu0 0.0
    %172 = vmatpush1.msra.mxu0 0.0
    %173 = vmatprep.subr.mxu0 0.0
    %174 = vmatpush1.msra.mxu0 0.0
    %175 = vmatprep.subr.mxu0 0.0
    %176 = vmatpush1.msra.mxu0 0.0
    %177 = vmatprep.subr.mxu0 0.0
    %178 = vmatpush1.msra.mxu0 0.0
    %179 = vmatprep.subr.mxu0 0.0
    %180 = vmatpush1.msra.mxu0 0.0
    %181 = vmatprep.mubr.f32.mxu0 0.0
    %182 = vmatmul.mubr.f32.gmra.mrb[0].mxu0 %v115
    %v183 = vpop.f32.mrb[0].mxu0
    %v184 = vadd.f32 %v111, %v183
    %v185 = vpop.f32.mrb[0].mxu0
    %186 = vdwg.mxu0
    %v187 = vmax.f32 %v184, 0.0
    %v188 = vld [vmem:[#allocation7] sm:$0xff]
    %v189 = vld [vmem:[#allocation7 + $0x8] sm:$0xff]
    %v190 = vld [vmem:[#allocation7 + $0x10] sm:$0xff]
    %v191 = vld [vmem:[#allocation7 + $0x18] sm:$0xff]
    %v192 = vld [vmem:[#allocation7 + $0x20] sm:$0xff]
    %v193 = vld [vmem:[#allocation7 + $0x28] sm:$0xff]
    %v194 = vld [vmem:[#allocation7 + $0x30] sm:$0xff]
    %v195 = vld [vmem:[#allocation7 + $0x38] sm:$0xff]
    %v196 = vld [vmem:[#allocation7 + $0x40] sm:$0xff]
    %v197 = vld [vmem:[#allocation7 + $0x48] sm:$0xff]
    %v198 = vld [vmem:[#allocation7 + $0x50] sm:$0xff]
    %v199 = vld [vmem:[#allocation7 + $0x58] sm:$0xff]
    %v200 = vld [vmem:[#allocation7 + $0x60] sm:$0xff]
    %v201 = vld [vmem:[#allocation7 + $0x68] sm:$0xff]
    %v202 = vld [vmem:[#allocation7 + $0x70] sm:$0xff]
    %v203 = vld [vmem:[#allocation7 + $0x78] sm:$0xff]
    %v204 = vld [vmem:[%s4] sm:$0x1]
    %v206 = vlaneseq
    %v207 = vshrl.u32 %v206, 7
    %v208 = vsub.s32 0, %v207
    %v209 = vrot.slane %v204, %v208
    %211 = vmatprep.subr.mxu0 0.0
    %212 = vmatpush1.msra.mxu0 %v188
    %213 = vmatprep.subr.mxu0 0.0
    %214 = vmatpush1.msra.mxu0 %v189
    %215 = vmatprep.subr.mxu0 0.0
    %216 = vmatpush1.msra.mxu0 %v190
    %217 = vmatprep.subr.mxu0 0.0
    %218 = vmatpush1.msra.mxu0 %v191
    %219 = vmatprep.subr.mxu0 0.0
    %220 = vmatpush1.msra.mxu0 %v192
    %221 = vmatprep.subr.mxu0 0.0
    %222 = vmatpush1.msra.mxu0 %v193
    %223 = vmatprep.subr.mxu0 0.0
    %224 = vmatpush1.msra.mxu0 %v194
    %225 = vmatprep.subr.mxu0 0.0
    %226 = vmatpush1.msra.mxu0 %v195
    %227 = vmatprep.subr.mxu0 0.0
    %228 = vmatpush1.msra.mxu0 %v196
    %229 = vmatprep.subr.mxu0 0.0
    %230 = vmatpush1.msra.mxu0 %v197
    %231 = vmatprep.subr.mxu0 0.0
    %232 = vmatpush1.msra.mxu0 %v198
    %233 = vmatprep.subr.mxu0 0.0
    %234 = vmatpush1.msra.mxu0 %v199
    %235 = vmatprep.subr.mxu0 0.0
    %236 = vmatpush1.msra.mxu0 %v200
    %237 = vmatprep.subr.mxu0 0.0
    %238 = vmatpush1.msra.mxu0 %v201
    %239 = vmatprep.subr.mxu0 0.0
    %240 = vmatpush1.msra.mxu0 %v202
    %241 = vmatprep.subr.mxu0 0.0
    %242 = vmatpush1.msra.mxu0 %v203
    %243 = vmatprep.subr.mxu0 0.0
    %244 = vmatpush1.msra.mxu0 0.0
    %245 = vmatprep.subr.mxu0 0.0
    %246 = vmatpush1.msra.mxu0 0.0
    %247 = vmatprep.subr.mxu0 0.0
    %248 = vmatpush1.msra.mxu0 0.0
    %249 = vmatprep.subr.mxu0 0.0
    %250 = vmatpush1.msra.mxu0 0.0
    %251 = vmatprep.subr.mxu0 0.0
    %252 = vmatpush1.msra.mxu0 0.0
    %253 = vmatprep.subr.mxu0 0.0
    %254 = vmatpush1.msra.mxu0 0.0
    %255 = vmatprep.subr.mxu0 0.0
    %256 = vmatpush1.msra.mxu0 0.0
    %257 = vmatprep.subr.mxu0 0.0
    %258 = vmatpush1.msra.mxu0 0.0
    %259 = vmatprep.subr.mxu0 0.0
    %260 = vmatpush1.msra.mxu0 0.0
    %261 = vmatprep.subr.mxu0 0.0
    %262 = vmatpush1.msra.mxu0 0.0
    %263 = vmatprep.subr.mxu0 0.0
    %264 = vmatpush1.msra.mxu0 0.0
    %265 = vmatprep.subr.mxu0 0.0
    %266 = vmatpush1.msra.mxu0 0.0
    %267 = vmatprep.subr.mxu0 0.0
    %268 = vmatpush1.msra.mxu0 0.0
    %269 = vmatprep.subr.mxu0 0.0
    %270 = vmatpush1.msra.mxu0 0.0
    %271 = vmatprep.subr.mxu0 0.0
    %272 = vmatpush1.msra.mxu0 0.0
    %273 = vmatprep.subr.mxu0 0.0
    %274 = vmatpush1.msra.mxu0 0.0
    %275 = vmatprep.mubr.f32.mxu0 0.0
    %276 = vmatmul.mubr.f32.gmra.mrb[0].mxu0 %v187
    %v277 = vpop.f32.mrb[0].mxu0
    %v278 = vadd.f32 %v209, %v277
    %v279 = vpop.f32.mrb[0].mxu0
    %280 = vdwg.mxu0
    %v281 = vmax.f32 %v278, 0.0
    %v282 = vld [vmem:[#allocation8] sm:$0xff]
    %v283 = vld [vmem:[#allocation8 + $0x8] sm:$0xff]
    %v284 = vld [vmem:[#allocation8 + $0x10] sm:$0xff]
    %v285 = vld [vmem:[#allocation8 + $0x18] sm:$0xff]
    %v286 = vld [vmem:[#allocation8 + $0x20] sm:$0xff]
    %v287 = vld [vmem:[#allocation8 + $0x28] sm:$0xff]
    %v288 = vld [vmem:[#allocation8 + $0x30] sm:$0xff]
    %v289 = vld [vmem:[#allocation8 + $0x38] sm:$0xff]
    %v290 = vld [vmem:[#allocation8 + $0x40] sm:$0xff]
    %v291 = vld [vmem:[#allocation8 + $0x48] sm:$0xff]
    %v292 = vld [vmem:[#allocation8 + $0x50] sm:$0xff]
    %v293 = vld [vmem:[#allocation8 + $0x58] sm:$0xff]
    %v294 = vld [vmem:[#allocation8 + $0x60] sm:$0xff]
    %v295 = vld [vmem:[#allocation8 + $0x68] sm:$0xff]
    %v296 = vld [vmem:[#allocation8 + $0x70] sm:$0xff]
    %v297 = vld [vmem:[#allocation8 + $0x78] sm:$0xff]
    %v298 = vld [vmem:[%s6] sm:$0x1]
    %v300 = vlaneseq
    %v301 = vshrl.u32 %v300, 7
    %v302 = vsub.s32 0, %v301
    %v303 = vrot.slane %v298, %v302
    %305 = vmatprep.subr.mxu0 0.0
    %306 = vmatpush1.msra.mxu0 %v282
    %307 = vmatprep.subr.mxu0 0.0
    %308 = vmatpush1.msra.mxu0 %v283
    %309 = vmatprep.subr.mxu0 0.0
    %310 = vmatpush1.msra.mxu0 %v284
    %311 = vmatprep.subr.mxu0 0.0
    %312 = vmatpush1.msra.mxu0 %v285
    %313 = vmatprep.subr.mxu0 0.0
    %314 = vmatpush1.msra.mxu0 %v286
    %315 = vmatprep.subr.mxu0 0.0
    %316 = vmatpush1.msra.mxu0 %v287
    %317 = vmatprep.subr.mxu0 0.0
    %318 = vmatpush1.msra.mxu0 %v288
    %319 = vmatprep.subr.mxu0 0.0
    %320 = vmatpush1.msra.mxu0 %v289
    %321 = vmatprep.subr.mxu0 0.0
    %322 = vmatpush1.msra.mxu0 %v290
    %323 = vmatprep.subr.mxu0 0.0
    %324 = vmatpush1.msra.mxu0 %v291
    %325 = vmatprep.subr.mxu0 0.0
    %326 = vmatpush1.msra.mxu0 %v292
    %327 = vmatprep.subr.mxu0 0.0
    %328 = vmatpush1.msra.mxu0 %v293
    %329 = vmatprep.subr.mxu0 0.0
    %330 = vmatpush1.msra.mxu0 %v294
    %331 = vmatprep.subr.mxu0 0.0
    %332 = vmatpush1.msra.mxu0 %v295
    %333 = vmatprep.subr.mxu0 0.0
    %334 = vmatpush1.msra.mxu0 %v296
    %335 = vmatprep.subr.mxu0 0.0
    %336 = vmatpush1.msra.mxu0 %v297
    %337 = vmatprep.subr.mxu0 0.0
    %338 = vmatpush1.msra.mxu0 0.0
    %339 = vmatprep.subr.mxu0 0.0
    %340 = vmatpush1.msra.mxu0 0.0
    %341 = vmatprep.subr.mxu0 0.0
    %342 = vmatpush1.msra.mxu0 0.0
    %343 = vmatprep.subr.mxu0 0.0
    %344 = vmatpush1.msra.mxu0 0.0
    %345 = vmatprep.subr.mxu0 0.0
    %346 = vmatpush1.msra.mxu0 0.0
    %347 = vmatprep.subr.mxu0 0.0
    %348 = vmatpush1.msra.mxu0 0.0
    %349 = vmatprep.subr.mxu0 0.0
    %350 = vmatpush1.msra.mxu0 0.0
    %351 = vmatprep.subr.mxu0 0.0
    %352 = vmatpush1.msra.mxu0 0.0
    %353 = vmatprep.subr.mxu0 0.0
    %354 = vmatpush1.msra.mxu0 0.0
    %355 = vmatprep.subr.mxu0 0.0
    %356 = vmatpush1.msra.mxu0 0.0
    %357 = vmatprep.subr.mxu0 0.0
    %358 = vmatpush1.msra.mxu0 0.0
    %359 = vmatprep.subr.mxu0 0.0
    %360 = vmatpush1.msra.mxu0 0.0
    %361 = vmatprep.subr.mxu0 0.0
    %362 = vmatpush1.msra.mxu0 0.0
    %363 = vmatprep.subr.mxu0 0.0
    %364 = vmatpush1.msra.mxu0 0.0
    %365 = vmatprep.subr.mxu0 0.0
    %366 = vmatpush1.msra.mxu0 0.0
    %367 = vmatprep.subr.mxu0 0.0
    %368 = vmatpush1.msra.mxu0 0.0
    %369 = vmatprep.mubr.f32.mxu0 0.0
    %370 = vmatmul.mubr.f32.gmra.mrb[0].mxu0 %v281
    %v371 = vpop.f32.mrb[0].mxu0
    %v372 = vadd.f32 %v303, %v371
    %v373 = vpop.f32.mrb[0].mxu0
    %374 = vdwg.mxu0
    %v375 = vmax.f32 %v372, 0.0
    %v376 = vld [vmem:[#allocation10] sm:$0xff]
    %v377 = vld [vmem:[#allocation10 + $0x8] sm:$0xff]
    %v378 = vld [vmem:[#allocation10 + $0x10] sm:$0xff]
    %v379 = vld [vmem:[#allocation10 + $0x18] sm:$0xff]
    %v380 = vld [vmem:[#allocation10 + $0x20] sm:$0xff]
    %v381 = vld [vmem:[#allocation10 + $0x28] sm:$0xff]
    %v382 = vld [vmem:[#allocation10 + $0x30] sm:$0xff]
    %v383 = vld [vmem:[#allocation10 + $0x38] sm:$0xff]
    %v384 = vld [vmem:[#allocation10 + $0x40] sm:$0xff]
    %v385 = vld [vmem:[#allocation10 + $0x48] sm:$0xff]
    %v386 = vld [vmem:[#allocation10 + $0x50] sm:$0xff]
    %v387 = vld [vmem:[#allocation10 + $0x58] sm:$0xff]
    %v388 = vld [vmem:[#allocation10 + $0x60] sm:$0xff]
    %v389 = vld [vmem:[#allocation10 + $0x68] sm:$0xff]
    %v390 = vld [vmem:[#allocation10 + $0x70] sm:$0xff]
    %v391 = vld [vmem:[#allocation10 + $0x78] sm:$0xff]
    %v392 = vld [vmem:[%s8] sm:$0x1]
    %v394 = vlaneseq
    %v395 = vshrl.u32 %v394, 7
    %v396 = vsub.s32 0, %v395
    %v397 = vrot.slane %v392, %v396
    %399 = vmatprep.subr.mxu0 0.0
    %400 = vmatpush1.msra.mxu0 %v376
    %401 = vmatprep.subr.mxu0 0.0
    %402 = vmatpush1.msra.mxu0 %v377
    %403 = vmatprep.subr.mxu0 0.0
    %404 = vmatpush1.msra.mxu0 %v378
    %405 = vmatprep.subr.mxu0 0.0
    %406 = vmatpush1.msra.mxu0 %v379
    %407 = vmatprep.subr.mxu0 0.0
    %408 = vmatpush1.msra.mxu0 %v380
    %409 = vmatprep.subr.mxu0 0.0
    %410 = vmatpush1.msra.mxu0 %v381
    %411 = vmatprep.subr.mxu0 0.0
    %412 = vmatpush1.msra.mxu0 %v382
    %413 = vmatprep.subr.mxu0 0.0
    %414 = vmatpush1.msra.mxu0 %v383
    %415 = vmatprep.subr.mxu0 0.0
    %416 = vmatpush1.msra.mxu0 %v384
    %417 = vmatprep.subr.mxu0 0.0
    %418 = vmatpush1.msra.mxu0 %v385
    %419 = vmatprep.subr.mxu0 0.0
    %420 = vmatpush1.msra.mxu0 %v386
    %421 = vmatprep.subr.mxu0 0.0
    %422 = vmatpush1.msra.mxu0 %v387
    %423 = vmatprep.subr.mxu0 0.0
    %424 = vmatpush1.msra.mxu0 %v388
    %425 = vmatprep.subr.mxu0 0.0
    %426 = vmatpush1.msra.mxu0 %v389
    %427 = vmatprep.subr.mxu0 0.0
    %428 = vmatpush1.msra.mxu0 %v390
    %429 = vmatprep.subr.mxu0 0.0
    %430 = vmatpush1.msra.mxu0 %v391
    %431 = vmatprep.subr.mxu0 0.0
    %432 = vmatpush1.msra.mxu0 0.0
    %433 = vmatprep.subr.mxu0 0.0
    %434 = vmatpush1.msra.mxu0 0.0
    %435 = vmatprep.subr.mxu0 0.0
    %436 = vmatpush1.msra.mxu0 0.0
    %437 = vmatprep.subr.mxu0 0.0
    %438 = vmatpush1.msra.mxu0 0.0
    %439 = vmatprep.subr.mxu0 0.0
    %440 = vmatpush1.msra.mxu0 0.0
    %441 = vmatprep.subr.mxu0 0.0
    %442 = vmatpush1.msra.mxu0 0.0
    %443 = vmatprep.subr.mxu0 0.0
    %444 = vmatpush1.msra.mxu0 0.0
    %445 = vmatprep.subr.mxu0 0.0
    %446 = vmatpush1.msra.mxu0 0.0
    %447 = vmatprep.subr.mxu0 0.0
    %448 = vmatpush1.msra.mxu0 0.0
    %449 = vmatprep.subr.mxu0 0.0
    %450 = vmatpush1.msra.mxu0 0.0
    %451 = vmatprep.subr.mxu0 0.0
    %452 = vmatpush1.msra.mxu0 0.0
    %453 = vmatprep.subr.mxu0 0.0
    %454 = vmatpush1.msra.mxu0 0.0
    %455 = vmatprep.subr.mxu0 0.0
    %456 = vmatpush1.msra.mxu0 0.0
    %457 = vmatprep.subr.mxu0 0.0
    %458 = vmatpush1.msra.mxu0 0.0
    %459 = vmatprep.subr.mxu0 0.0
    %460 = vmatpush1.msra.mxu0 0.0
    %461 = vmatprep.subr.mxu0 0.0
    %462 = vmatpush1.msra.mxu0 0.0
    %463 = vmatprep.mubr.f32.mxu0 0.0
    %464 = vmatmul.mubr.f32.gmra.mrb[0].mxu0 %v375
    %v465 = vpop.f32.mrb[0].mxu0
    %v466 = vadd.f32 %v397, %v465
    %v467 = vpop.f32.mrb[0].mxu0
    %468 = vdwg.mxu0
    %vm469 = vcmask 64512
    %470 = vst.msk [vmem:[#allocation11] sm:$0xff] %vm469, %v466
    %472 = vrot.lane.b32.xlu0 %v466, 120
    %v473 = vpop.permute.xlu0 %472
    %vm475 = vcmask 7168
    %476 = vst.msk [vmem:[%s10] sm:$0xff] %vm475, %v473
    // Predicated region
    $region58: #{tpu_custom_call.1} parent=1 // pred_check
      _
    $region59: #{tpu_custom_call.1} parent=1 // pred_check_branch
      %478 = sbr.rel (0) target = $region61
    $region60: #{tpu_custom_call.1} parent=1 // pred_region
      %s480 = ssub.s32 128, 128
      %481 = vsyncadd [#allocation4], %s480
      %s483 = sshll.u32 [#allocation11], 4
      %s484 = int_to_ptr.vmem [resolvable:$true] %s483
      %486 = dma.vmem_to_hbm [thread:$0]  %s484, 128, %s9, [#allocation4]
    $region61: #{tpu_custom_call.1} parent=1 // pred_fallthru
      _
    // Predicated region
    $region62: #{tpu_custom_call.1} parent=1 // pred_check
      _
    $region63: #{tpu_custom_call.1} parent=1 // pred_check_branch
      %488 = sbr.rel (0) target = $region65
    $region64: #{tpu_custom_call.1} parent=1 // pred_region
      _
    $region65: #{tpu_custom_call.1} parent=1 // pred_fallthru
      _
    // Predicated region
    $region66: #{tpu_custom_call.1} parent=1 // pred_check
      _
    $region67: #{tpu_custom_call.1} parent=1 // pred_check_branch
      %490 = sbr.rel (0) target = $region69
    $region68: #{tpu_custom_call.1} parent=1 // pred_region
      %491 = dma.done [#allocation4], 128
    $region69: #{tpu_custom_call.1} parent=1 // pred_fallthru
      _
    // Predicated region
    $region70: #{tpu_custom_call.1} parent=1 // pred_check
      _
    $region71: #{tpu_custom_call.1} parent=1 // pred_check_branch
      %493 = sbr.rel (0) target = $region73
    $region72: #{tpu_custom_call.1} parent=1 // pred_region
      _
    $region73: #{tpu_custom_call.1} parent=1 // pred_fallthru
      _
    %494 = vsyncpa [#allocation3], 1
    %495 = vsyncpa [#allocation6], 1
    %496 = vsyncpa [#allocation9], 1
    %497 = vsyncpa [#allocation4], 1

</llo_original>
